<compile_context>
chip_gen: v7x
topology: tpu7x:2x2x1
jax: 0.10.0
libtpu: 0.0.40
codegen_flags: <defaults>
</compile_context>

<pallas_src>
import jax
import jax.numpy as jnp
from jax import lax
from jax.experimental import pallas as pl
from jax.experimental.pallas import tpu as pltpu

BN_EPS = 1e-5


def _conv_stats_kernel(xcol_ref, w_ref, conv_ref, stat_ref):
    """Pass 1: one big matmul -> conv output block + partial BN statistics."""
    x = xcol_ref[0]                                        # [K, block_n]
    acc = jnp.dot(w_ref[...], x,                           # [C_out, block_n] f32
                  preferred_element_type=jnp.float32)
    conv_ref[0] = acc.astype(conv_ref.dtype)               # one lane-dense store
    stat_ref[0, 0, :, 0:1] = jnp.sum(acc, axis=1, keepdims=True)
    stat_ref[0, 0, :, 1:2] = jnp.sum(acc * acc, axis=1, keepdims=True)


def _bn_elu_kernel(conv_ref, ss_ref, o_ref):
    """Pass 2: folded BatchNorm (scale/shift) + ELU, purely elementwise."""
    y = conv_ref[0].astype(jnp.float32)                    # [C_out, block_n]
    y = y * ss_ref[:, 0:1] + ss_ref[:, 1:2]
    y = jnp.where(y > 0, y, jnp.expm1(y))                  # ELU(alpha=1)
    o_ref[0] = y.astype(o_ref.dtype)


def _choose_block_n(n_pad, bytes_per_col_buffered, vmem_budget_bytes):
    """Largest multiple of 128 dividing n_pad whose (double-buffered) block
    fits the VMEM budget.  n_pad is always a multiple of 128."""
    max_cols = max(vmem_budget_bytes // max(bytes_per_col_buffered, 1), 128)
    best = 128
    b = 128
    while b <= min(n_pad, max_cols):
        if n_pad % b == 0:
            best = b
        b += 128
    return min(best, n_pad)


def causal_conv_block(x, weight, bias, gamma, beta, *,
                      matmul_dtype=jnp.bfloat16,
                      vmem_budget_bytes=32 << 20,
                      vmem_limit_bytes=48 << 20):
    """x: [B, C_in, F, T] (NCHW).  weight: [C_out, C_in, 3, 2].

    Returns [B, C_out, F_out, T] with F_out = (F - 3) // 2 + 1.
    """
    B, C_in, F, T = x.shape
    C_out = weight.shape[0]
    F_out = (F - 3) // 2 + 1
    N = F_out * T
    K = 6 * C_in
    del bias   # conv bias is cancelled exactly by the BN mean subtraction

    conv_dtype = matmul_dtype
    mm_bytes = jnp.dtype(matmul_dtype).itemsize
    conv_bytes = jnp.dtype(conv_dtype).itemsize
    out_bytes = jnp.dtype(x.dtype).itemsize

    # Lane-pad the merged (F_out*T) axis to a multiple of 128: lane-dense,
    # full-sized blocks and an exactly-dividing grid (zero columns add nothing
    # to the BN statistics and are sliced off below).
    N_pad = pl.cdiv(N, 128) * 128
    bytes_per_col = 2 * max(K * mm_bytes + C_out * conv_bytes,     # pass 1
                            C_out * conv_bytes + C_out * out_bytes)  # pass 2
    block_n = _choose_block_n(N_pad, bytes_per_col, vmem_budget_bytes)
    nb = N_pad // block_n
    grid = (B, nb)

    # ---- wrapper-side im2col: xcol[b, (kf*2+kt)*C_in + ci, fo*T + t] ----
    #      = x_leftpad[b, ci, 2*fo + kf, t + kt]
    # (left time pad of 1 + dropping the last output column reproduces
    #  padding=(0,1) followed by the causal slice [:, :, :, :-1]).
    x_lp = jnp.pad(x, ((0, 0), (0, 0), (0, 0), (1, 0)))     # [B, C_in, F, T+1]
    cols = []
    for kf in range(3):
        for kt in range(2):
            cols.append(x_lp[:, :, kf:kf + 2 * F_out:2, kt:kt + T])
    xcol = jnp.concatenate(cols, axis=1)                    # [B, 6*C_in, F_out, T]
    xcol = xcol.reshape(B, K, N)
    xcol = jnp.pad(xcol, ((0, 0), (0, 0), (0, N_pad - N)))
    xcol = xcol.astype(matmul_dtype)

    # weight[o, ci, kf, kt] -> w2d[o, (kf*2+kt)*C_in + ci]
    w2d = jnp.transpose(weight, (0, 2, 3, 1)).reshape(C_out, K).astype(matmul_dtype)

    xcol_spec = pl.BlockSpec((1, K, block_n), lambda b, n: (b, 0, n))
    w_spec = pl.BlockSpec((C_out, K), lambda b, n: (0, 0))
    conv_spec = pl.BlockSpec((1, C_out, block_n), lambda b, n: (b, 0, n))
    stat_spec = pl.BlockSpec((1, 1, C_out, 2), lambda b, n: (b, n, 0, 0))
    ss_spec = pl.BlockSpec((C_out, 2), lambda b, n: (0, 0))

    cparams = pltpu.CompilerParams(
        dimension_semantics=("parallel", "parallel"),
        vmem_limit_bytes=vmem_limit_bytes)

    # ---- pass 1: conv matmul -> stored conv output + partial BN stats ----
    conv_out, stats = pl.pallas_call(
        _conv_stats_kernel,
        out_shape=(jax.ShapeDtypeStruct((B, C_out, N_pad), conv_dtype),
                   jax.ShapeDtypeStruct((B, nb, C_out, 2), jnp.float32)),
        grid=grid,
        in_specs=[xcol_spec, w_spec],
        out_specs=(conv_spec, stat_spec),
        compiler_params=cparams,
    )(xcol, w2d)

    # ---- fold BN into a per-channel scale/shift (tiny, done in XLA) ----
    totals = jnp.sum(stats, axis=(0, 1))                    # [C_out, 2]
    n = B * F_out * T
    mean = totals[:, 0] / n
    var = jnp.maximum(totals[:, 1] / n - mean * mean, 0.0)  # biased variance
    scale = gamma.astype(jnp.float32) * lax.rsqrt(var + BN_EPS)
    shift = beta.astype(jnp.float32) - mean * scale
    ss = jnp.stack([scale, shift], axis=1)                  # [C_out, 2]

    # ---- pass 2: elementwise BN affine + ELU over the stored conv output ----
    out = pl.pallas_call(
        _bn_elu_kernel,
        out_shape=jax.ShapeDtypeStruct((B, C_out, N_pad), x.dtype),
        grid=grid,
        in_specs=[conv_spec, ss_spec],
        out_specs=conv_spec,
        compiler_params=cparams,
    )(conv_out, ss)

    return out[:, :, :N].reshape(B, C_out, F_out, T)


def _reference(x, weight, bias, gamma, beta):
    """Pure-JAX reference mirroring the PyTorch forward (training-mode BN)."""
    conv = lax.conv_general_dilated(
        x, weight,
        window_strides=(2, 1),
        padding=((0, 0), (1, 1)),
        dimension_numbers=("NCHW", "OIHW", "NCHW"),
    ) + bias.reshape(1, -1, 1, 1)
    conv = conv[:, :, :, :-1]
    mean = jnp.mean(conv, axis=(0, 2, 3), keepdims=True)
    var = jnp.mean((conv - mean) ** 2, axis=(0, 2, 3), keepdims=True)
    xhat = (conv - mean) * lax.rsqrt(var + BN_EPS)
    y = xhat * gamma.reshape(1, -1, 1, 1) + beta.reshape(1, -1, 1, 1)
    return jnp.where(y > 0, y, jnp.expm1(y))


if __name__ == "__main__":
    B, C_in, C_out, F, T = 2, 4, 8, 16, 16

    key = jax.random.PRNGKey(0)
    kx, kw, kb, kg, kbeta = jax.random.split(key, 5)
    x = jax.random.normal(kx, (B, C_in, F, T), dtype=jnp.float32)
    weight = 0.1 * jax.random.normal(kw, (C_out, C_in, 3, 2), dtype=jnp.float32)
    bias = 0.1 * jax.random.normal(kb, (C_out,), dtype=jnp.float32)
    gamma = 1.0 + 0.1 * jax.random.normal(kg, (C_out,), dtype=jnp.float32)
    beta = 0.1 * jax.random.normal(kbeta, (C_out,), dtype=jnp.float32)

    ref = jax.block_until_ready(_reference(x, weight, bias, gamma, beta))

    # f32 matmul/storage path: tight check against the pure-JAX reference.
    out_f32 = jax.block_until_ready(
        causal_conv_block(x, weight, bias, gamma, beta,
                          matmul_dtype=jnp.float32))
    F_out = (F - 3) // 2 + 1
    assert out_f32.shape == (B, C_out, F_out, T)
    assert jnp.allclose(out_f32, ref, atol=1e-4, rtol=1e-4)

    # bf16 matmul/storage path (default; halves HBM/VMEM traffic of the
    # dominant operands, f32 MXU accumulation): looser tolerance.
    out_bf16 = jax.block_until_ready(
        causal_conv_block(x, weight, bias, gamma, beta))
    assert out_bf16.shape == out_f32.shape
    assert jnp.allclose(out_bf16, ref, atol=5e-2, rtol=5e-2)

    print("KERNEL_OK")
</pallas_src>

<mosaic_0001>
module attributes {stable_mosaic.version = 11 : i64} {
  func.func @_conv_stats_kernel(%arg0: i32, %arg1: i32, %arg2: memref<1x24x128xf32, #tpu.memory_space<vmem>>, %arg3: memref<8x24xf32, #tpu.memory_space<vmem>>, %arg4: memref<1x8x128xf32, #tpu.memory_space<vmem>>, %arg5: memref<1x1x8x2xf32, #tpu.memory_space<vmem>>) attributes {dimension_semantics = [#tpu.dimension_semantics<parallel>, #tpu.dimension_semantics<parallel>], iteration_bounds = array<i64: 2, 1>, scalar_prefetch = 0 : i64, scratch_operands = 0 : i64, tpu.core_type = #tpu.core_type<tc>, window_params = [{transform_indices = @transform_0, window_bounds = array<i64: 1, 24, 128>}, {pipeline_mode = #tpu.pipeline_mode<synchronous>, transform_indices = @transform_1, window_bounds = array<i64: 8, 24>}, {transform_indices = @transform_2, window_bounds = array<i64: 1, 8, 128>}, {transform_indices = @transform_3, window_bounds = array<i64: 1, 1, 8, 2>}]} {
    %c0 = arith.constant 0 : index
    %c0_0 = arith.constant 0 : index
    %c0_1 = arith.constant 0 : index
    %0 = vector.load %arg2[%c0, %c0_0, %c0_1] : memref<1x24x128xf32, #tpu.memory_space<vmem>>, vector<1x24x128xf32>
    %1 = vector.shape_cast %0 : vector<1x24x128xf32> to vector<24x128xf32>
    %c0_2 = arith.constant 0 : index
    %c0_3 = arith.constant 0 : index
    %2 = vector.load %arg3[%c0_2, %c0_3] : memref<8x24xf32, #tpu.memory_space<vmem>>, vector<8x24xf32>
    %cst = arith.constant dense<0.000000e+00> : vector<8x128xf32>
    %3 = tpu.matmul %2, %1, %cst {dimension_numbers = #tpu.dot_dimension_numbers<[1], [0], [0], [1], [0, 0, 1, 1], [], []>} : vector<8x24xf32>, vector<24x128xf32>, vector<8x128xf32> -> vector<8x128xf32>
    %c0_4 = arith.constant 0 : index
    %c0_5 = arith.constant 0 : index
    %c0_6 = arith.constant 0 : index
    %4 = vector.load %arg4[%c0_4, %c0_5, %c0_6] : memref<1x8x128xf32, #tpu.memory_space<vmem>>, vector<1x8x128xf32>
    %5 = vector.shape_cast %4 : vector<1x8x128xf32> to vector<8x128xf32>
    %6 = vector.shape_cast %3 : vector<8x128xf32> to vector<1x8x128xf32>
    tpu.vector_store %arg4[%c0_4, %c0_5, %c0_6], %6 {strides = array<i32>} : memref<1x8x128xf32, #tpu.memory_space<vmem>>, vector<1x8x128xf32>,
    %cst_7 = arith.constant dense<0.000000e+00> : vector<8xf32>
    %7 = vector.multi_reduction <add>, %3, %cst_7 [1] : vector<8x128xf32> to vector<8xf32>
    %8 = vector.shape_cast %7 : vector<8xf32> to vector<8x1xf32>
    %c0_8 = arith.constant 0 : index
    %c0_9 = arith.constant 0 : index
    %c0_10 = arith.constant 0 : index
    %c0_11 = arith.constant 0 : index
    %9 = vector.load %arg5[%c0_8, %c0_9, %c0_10, %c0_11] : memref<1x1x8x2xf32, #tpu.memory_space<vmem>>, vector<1x1x8x1xf32>
    %10 = vector.shape_cast %9 : vector<1x1x8x1xf32> to vector<8x1xf32>
    %11 = vector.shape_cast %8 : vector<8x1xf32> to vector<1x1x8x1xf32>
    tpu.vector_store %arg5[%c0_8, %c0_9, %c0_10, %c0_11], %11 {strides = array<i32>} : memref<1x1x8x2xf32, #tpu.memory_space<vmem>>, vector<1x1x8x1xf32>,
    %12 = arith.mulf %3, %3 : vector<8x128xf32>
    %cst_12 = arith.constant dense<0.000000e+00> : vector<8xf32>
    %13 = vector.multi_reduction <add>, %12, %cst_12 [1] : vector<8x128xf32> to vector<8xf32>
    %14 = vector.shape_cast %13 : vector<8xf32> to vector<8x1xf32>
    %c0_13 = arith.constant 0 : index
    %c0_14 = arith.constant 0 : index
    %c0_15 = arith.constant 0 : index
    %c1 = arith.constant 1 : index
    %15 = vector.load %arg5[%c0_13, %c0_14, %c0_15, %c1] : memref<1x1x8x2xf32, #tpu.memory_space<vmem>>, vector<1x1x8x1xf32>
    %16 = vector.shape_cast %15 : vector<1x1x8x1xf32> to vector<8x1xf32>
    %17 = vector.shape_cast %14 : vector<8x1xf32> to vector<1x1x8x1xf32>
    tpu.vector_store %arg5[%c0_13, %c0_14, %c0_15, %c1], %17 {strides = array<i32>} : memref<1x1x8x2xf32, #tpu.memory_space<vmem>>, vector<1x1x8x1xf32>,
    return
  }
  func.func @transform_0(%arg0: i32, %arg1: i32) -> (i32, i32, i32) {
    %c0_i32 = arith.constant 0 : i32
    %c0_i32_0 = arith.constant 0 : i32
    return %arg0, %c0_i32, %arg1 : i32, i32, i32
  }
  func.func @transform_1(%arg0: i32, %arg1: i32) -> (i32, i32) {
    %c0_i32 = arith.constant 0 : i32
    %c0_i32_0 = arith.constant 0 : i32
    %c0_i32_1 = arith.constant 0 : i32
    return %c0_i32, %c0_i32_0 : i32, i32
  }
  func.func @transform_2(%arg0: i32, %arg1: i32) -> (i32, i32, i32) {
    %c0_i32 = arith.constant 0 : i32
    %c0_i32_0 = arith.constant 0 : i32
    return %arg0, %c0_i32, %arg1 : i32, i32, i32
  }
  func.func @transform_3(%arg0: i32, %arg1: i32) -> (i32, i32, i32, i32) {
    %c0_i32 = arith.constant 0 : i32
    %c0_i32_0 = arith.constant 0 : i32
    %c0_i32_1 = arith.constant 0 : i32
    return %arg0, %arg1, %c0_i32, %c0_i32_0 : i32, i32, i32, i32
  }
}

</mosaic_0001>

<llo_original>
// kernel: tpu_custom_call.1
$region0: #{tpu_custom_call.1}
  #allocation0 [shape = 'u32[]', space=smem, size = 0x4, offset = 0x4, fixed_abs, tag = 'smem constant byte address 0x4 - core index']
  #allocation1 [shape = 'u32[144,128]{1,0:T(1,128)}', space=vmem, size = 0x12000, scoped, tag = 'internal scratch']
  %s0 = inlined_call_operand.hbm [shape: f32[2,24,128], index: 0, kind: input, shape index: {}]
  %s1 = inlined_call_operand.hbm [shape: f32[8,24], index: 1, kind: input, shape index: {}]
  %s2 = inlined_call_operand.hbm [shape: f32[2,8,128], index: 2, kind: output, shape index: {0}]
  %s3 = inlined_call_operand.vmem [shape: f32[2,1,8,2], index: 3, kind: output, shape index: {1}]
  %4 = xla_tuple %s2, %s3
  %s5 = sld [smem:[#allocation0]]
  $region57: #{tpu_custom_call.1} parent=0
    _
  %s7 = ssub.s32 1, %s5
  %s8 = scalar_select 0, %s7, %s5
  $region1: #{tpu_custom_call.1} parent=0
    #allocation2 [shape = 'u8[24576]{0}', space=vmem, size = 0x6000, scoped, tag = 'input window, operand 0']
    #allocation3 [shape = 's32[2]{0}', space=sflag, size = 0x8, scoped, tag = 'scoped memory for tpu_custom_call.1']
    #allocation4 [shape = 's32[2]{0}', space=sflag, size = 0x8, scoped, tag = 'scoped memory for tpu_custom_call.1']
    #allocation5 [shape = 'u8[4096]{0}', space=vmem, size = 0x1000, scoped, tag = 'input window, operand 1, single buffered']
    #allocation6 [shape = 's32[1]{0}', space=sflag, size = 0x4, scoped, tag = 'scoped memory for tpu_custom_call.1']
    #allocation7 [shape = 'u8[8192]{0}', space=vmem, size = 0x2000, scoped, tag = 'output window, operand 0']
    %9 = vsyncpa [#allocation3], 0
    %s10 = scalar_lea.sflag [#allocation3], 1
    %11 = vsyncpa %s10, 0
    %12 = vsyncpa [#allocation6], 0
    %13 = vsyncpa [#allocation4], 0
    %s14 = scalar_lea.sflag [#allocation4], 1
    %15 = vsyncpa %s14, 0
    loop: start=0, step=1, limit=4
    $region2: #{tpu_custom_call.1} parent=1 // loop_pre_header
      _
    $region3: #{tpu_custom_call.1} parent=1 // loop_header
      %s17 = sphi 0, %s21
      %p18 = scmp.ge.s32.totalorder %s17, 4
      %s24 = sphi 0, %s36
      %s25 = sphi 0, %s32
      %s26 = sphi 0, %s24
      %s27 = sphi 0, %s25
      %s28 = sphi 0, %s26
      %s29 = sphi 0, %s27
      %s41 = sphi 0, %s43
      %s44 = sphi 0, %s41
      %s45 = sphi 0, %s44
      %s61 = sphi 0, %s45
      %s65 = sphi 0, %s65
      %s67 = sphi 0, %s65
      %s68 = sphi 0, %s67
      %s82 = sphi 0, %s68
      %s90 = sphi 0, %s92
      %s93 = sphi 0, %s90
      %s94 = sphi 0, %s93
      %s110 = sphi 0, %s94
      %s118 = sphi 0, %s120
      %s121 = sphi 0, %s118
      %s122 = sphi 0, %s121
      %s138 = sphi 0, %s122
    $region4: #{tpu_custom_call.1} parent=1 // loop_header_branch
      %20 = sbr.rel (%p18) target = $region8
    $region5: #{tpu_custom_call.1} parent=1 // loop_body
      %s22 = ssub.s32 %s17, 1
      %s23 = ssub.s32 %s17, 2
      %s30 = sadd.s32 1, %s25
      %p31 = scmp.ge.s32.totalorder %s30, 1
      %s32 = scalar_select %p31, 0, %s30
      %s33 = sadd.s32 1, %s24
      %s34 = scalar_select %p31, %s33, %s24
      %p35 = scmp.ge.s32.totalorder %s34, 2
      %s36 = scalar_select %p35, 0, %s34
      %s37 = ssub.s32 %s24, %s36
      %s38 = ssub.s32 %s25, %s32
      %s39 = sor.u32 %s37, %s38
      %p40 = scmp.eq.s32.totalorder %s39, 0
      %s42 = sadd.s32 %s41, 1
      %s43 = scalar_select %p40, %s41, %s42
      %p46 = pneg %p40
      %p47 = scmp.eq.s32.totalorder %s17, 1
      %p48 = por %p46, %p47
      %p49 = scmp.ne.s32.totalorder %s41, %s44
      %p50 = scmp.eq.s32.totalorder %s17, 0
      %p51 = por %p49, %p50
      %p52 = scmp.ne.s32.totalorder %s41, %s44
      %p53 = scmp.eq.s32.totalorder %s22, 1
      %p54 = por %p52, %p53
      %p55 = scmp.ne.s32.totalorder %s44, %s45
      %p56 = scmp.eq.s32.totalorder %s22, 0
      %p57 = por %p55, %p56
      %p58 = scmp.ne.s32.totalorder %s44, %s45
      %p59 = scmp.eq.s32.totalorder %s23, 1
      %p60 = por %p58, %p59
      %p62 = scmp.ne.s32.totalorder %s45, %s61
      %p63 = scmp.eq.s32.totalorder %s23, 0
      %p64 = por %p62, %p63
      %s66 = sadd.s32 %s65, 1
      %p69 = scmp.eq.s32.totalorder %s17, 1
      %p70 = scmp.ne.s32.totalorder %s65, %s67
      %p71 = scmp.eq.s32.totalorder %s17, 0
      %p72 = por %p70, %p71
      %p73 = scmp.ne.s32.totalorder %s65, %s67
      %p74 = scmp.eq.s32.totalorder %s22, 1
      %p75 = por %p73, %p74
      %p76 = scmp.ne.s32.totalorder %s67, %s68
      %p77 = scmp.eq.s32.totalorder %s22, 0
      %p78 = por %p76, %p77
      %p79 = scmp.ne.s32.totalorder %s67, %s68
      %p80 = scmp.eq.s32.totalorder %s23, 1
      %p81 = por %p79, %p80
      %p83 = scmp.ne.s32.totalorder %s68, %s82
      %p84 = scmp.eq.s32.totalorder %s23, 0
      %p85 = por %p83, %p84
      %s86 = ssub.s32 %s24, %s36
      %s87 = ssub.s32 %s25, %s32
      %s88 = sor.u32 %s86, %s87
      %p89 = scmp.eq.s32.totalorder %s88, 0
      %s91 = sadd.s32 %s90, 1
      %s92 = scalar_select %p89, %s90, %s91
      %p95 = pneg %p89
      %p96 = scmp.eq.s32.totalorder %s17, 1
      %p97 = por %p95, %p96
      %p98 = scmp.ne.s32.totalorder %s90, %s93
      %p99 = scmp.eq.s32.totalorder %s17, 0
      %p100 = por %p98, %p99
      %p101 = scmp.ne.s32.totalorder %s90, %s93
      %p102 = scmp.eq.s32.totalorder %s22, 1
      %p103 = por %p101, %p102
      %p104 = scmp.ne.s32.totalorder %s93, %s94
      %p105 = scmp.eq.s32.totalorder %s22, 0
      %p106 = por %p104, %p105
      %p107 = scmp.ne.s32.totalorder %s93, %s94
      %p108 = scmp.eq.s32.totalorder %s23, 1
      %p109 = por %p107, %p108
      %p111 = scmp.ne.s32.totalorder %s94, %s110
      %p112 = scmp.eq.s32.totalorder %s23, 0
      %p113 = por %p111, %p112
      %s114 = ssub.s32 %s24, %s36
      %s115 = ssub.s32 %s25, %s32
      %s116 = sor.u32 %s114, %s115
      %p117 = scmp.eq.s32.totalorder %s116, 0
      %s119 = sadd.s32 %s118, 1
      %s120 = scalar_select %p117, %s118, %s119
      %p123 = pneg %p117
      %p124 = scmp.eq.s32.totalorder %s17, 1
      %p125 = por %p123, %p124
      %p126 = scmp.ne.s32.totalorder %s118, %s121
      %p127 = scmp.eq.s32.totalorder %s17, 0
      %p128 = por %p126, %p127
      %p129 = scmp.ne.s32.totalorder %s118, %s121
      %p130 = scmp.eq.s32.totalorder %s22, 1
      %p131 = por %p129, %p130
      %p132 = scmp.ne.s32.totalorder %s121, %s122
      %p133 = scmp.eq.s32.totalorder %s22, 0
      %p134 = por %p132, %p133
      %p135 = scmp.ne.s32.totalorder %s121, %s122
      %p136 = scmp.eq.s32.totalorder %s23, 1
      %p137 = por %p135, %p136
      %p139 = scmp.ne.s32.totalorder %s122, %s138
      %p140 = scmp.eq.s32.totalorder %s23, 0
      %p141 = por %p139, %p140
      %p142 = scmp.le.s32.totalorder 1, %s17
      %p143 = scmp.lt.s32.totalorder %s17, 3
      %p144 = pnand %p142, %p143
      %p145 = pneg %p144
      // Predicated region
      $region9: #{tpu_custom_call.1} parent=5 // pred_check
        _
      $region10: #{tpu_custom_call.1} parent=5 // pred_check_branch
        %147 = sbr.rel (%p144) target = $region12
      $region11: #{tpu_custom_call.1} parent=5 // pred_region
        %s148 = ssub.s32 %s17, 1
        // Predicated region
        $region13: #{tpu_custom_call.1} parent=11 // pred_check
          %p149 = pneg %p78
        $region14: #{tpu_custom_call.1} parent=11 // pred_check_branch
          %151 = sbr.rel (%p149) target = $region16
        $region15: #{tpu_custom_call.1} parent=11 // pred_region
          %s153 = ssub.s32 128, 128
          %154 = vsyncadd [#allocation6], %s153
          %s156 = sshll.u32 [#allocation5], 4
          %s157 = int_to_ptr.vmem [resolvable:$true] %s156
          %159 = dma.hbm_to_vmem [thread:$0]  %s1, 128, %s157, [#allocation6]
        $region16: #{tpu_custom_call.1} parent=11 // pred_fallthru
          _
      $region12: #{tpu_custom_call.1} parent=5 // pred_fallthru
        _
      %p160 = scmp.lt.s32.totalorder %s17, 2
      // Predicated region
      $region17: #{tpu_custom_call.1} parent=5 // pred_check
        %p161 = pneg %p160
      $region18: #{tpu_custom_call.1} parent=5 // pred_check_branch
        %163 = sbr.rel (%p161) target = $region20
      $region19: #{tpu_custom_call.1} parent=5 // pred_region
        // Predicated region
        $region21: #{tpu_custom_call.1} parent=19 // pred_check
          %p164 = pneg %p51
        $region22: #{tpu_custom_call.1} parent=19 // pred_check_branch
          %166 = sbr.rel (%p164) target = $region24
        $region23: #{tpu_custom_call.1} parent=19 // pred_region
          %s167 = sand.u32 %s41, 1
          %s168 = scalar_lea.sflag [#allocation3], %s167
          %s169 = sand.u32 %s41, 1
          %s170 = smul.addr %s169, 24
          %s171 = scalar_lea.vmem [#allocation2], %s170
          %s173 = ssub.s32 384, 384
          %174 = vsyncadd %s168, %s173
          %s175 = smul.addr %s24, 3
          %s176 = sadd.s32 %s25, %s175
          %s177 = smul.addr %s176, 128
          %s178 = scalar_lea.hbm %s0, %s177
          %s179 = sshll.u32 %s171, 4
          %s180 = int_to_ptr.vmem [resolvable:$true] %s179
          %185 = dma.hbm_to_vmem [thread:$0]  %s178, 384, %s180, %s168, 128, 128, 8
        $region24: #{tpu_custom_call.1} parent=19 // pred_fallthru
          _
      $region20: #{tpu_custom_call.1} parent=5 // pred_fallthru
        _
      %p186 = scmp.le.s32.totalorder 1, %s17
      %p187 = scmp.lt.s32.totalorder %s17, 3
      %p188 = pnand %p186, %p187
      %p189 = pneg %p188
      // Predicated region
      $region25: #{tpu_custom_call.1} parent=5 // pred_check
        _
      $region26: #{tpu_custom_call.1} parent=5 // pred_check_branch
        %191 = sbr.rel (%p188) target = $region28
      $region27: #{tpu_custom_call.1} parent=5 // pred_region
        %s192 = ssub.s32 %s17, 1
        %s193 = sand.u32 %s44, 1
        %s194 = scalar_lea.sflag [#allocation3], %s193
        %s195 = sand.u32 %s44, 1
        %s196 = smul.addr %s195, 24
        %s197 = scalar_lea.vmem [#allocation2], %s196
        // Predicated region
        $region29: #{tpu_custom_call.1} parent=27 // pred_check
          %p198 = pneg %p57
        $region30: #{tpu_custom_call.1} parent=27 // pred_check_branch
          %200 = sbr.rel (%p198) target = $region32
        $region31: #{tpu_custom_call.1} parent=27 // pred_region
          %201 = dma.done %s194, 384
        $region32: #{tpu_custom_call.1} parent=27 // pred_fallthru
          _
        // Predicated region
        $region33: #{tpu_custom_call.1} parent=27 // pred_check
          %p202 = pneg %p78
        $region34: #{tpu_custom_call.1} parent=27 // pred_check_branch
          %204 = sbr.rel (%p202) target = $region36
        $region35: #{tpu_custom_call.1} parent=27 // pred_region
          %205 = dma.done [#allocation6], 128
        $region36: #{tpu_custom_call.1} parent=27 // pred_fallthru
          _
        %s206 = sand.u32 %s44, 1
        %s207 = scalar_lea.sflag [#allocation3], %s206
        %s208 = sand.u32 %s44, 1
        %s209 = smul.addr %s208, 24
        %s210 = scalar_lea.vmem [#allocation2], %s209
        %p211 = pneg %p57
        %p212 = pneg %p54
        %p213 = pneg %p78
        %p214 = pneg %p75
        %p215 = pneg %p106
        %p216 = pneg %p103
        %s217 = sand.u32 %s93, 1
        %s218 = scalar_lea.sflag [#allocation4], %s217
        %s219 = sand.u32 %s93, 1
        %s220 = smul.addr %s219, 8
        %s221 = scalar_lea.vmem [#allocation7], %s220
        %p222 = pneg %p134
        %p223 = pneg %p131
        %p224 = scmp.lt.s32.totalorder %s26, 1
        %s225 = scalar_select %p224, %s26, 1
        %p226 = scmp.lt.s32.totalorder %s27, 0
        %s227 = scalar_select %p226, %s27, 0
        %s228 = sadd.s32 %s227, %s225
        %s229 = smul.addr %s228, 8
        %s230 = scalar_lea.vmem %s3, %s229
        %p231 = scmp.lt.s32.totalorder %s26, 1
        %s232 = scalar_select %p231, %s26, 1
        %p233 = scmp.lt.s32.totalorder %s27, 0
        %s234 = scalar_select %p233, %s27, 0
        %s235 = sadd.s32 %s234, %s232
        %s236 = smul.addr %s235, 8
        %s237 = scalar_lea.vmem %s3, %s236
        %v238 = vld [vmem:[%s197] sm:$0xff]
        %v239 = vld [vmem:[%s197 + $0x8] sm:$0xff]
        %v240 = vld [vmem:[%s197 + $0x10] sm:$0xff]
        %v241 = vld [vmem:[#allocation5] sm:$0xff]
        %vm242 = vcmask 195584
        %v244 = vsel %vm242, %v241, 0
        %246 = vmatprep.subr.mxu0 0.0
        %247 = vmatpush1.msra.mxu0 %v238
        %248 = vmatprep.subr.mxu0 0.0
        %249 = vmatpush1.msra.mxu0 %v239
        %250 = vmatprep.subr.mxu0 0.0
        %251 = vmatpush1.msra.mxu0 %v240
        %252 = vmatprep.subr.mxu0 0.0
        %253 = vmatpush1.msra.mxu0 0.0
        %254 = vmatprep.subr.mxu0 0.0
        %255 = vmatpush1.msra.mxu0 0.0
        %256 = vmatprep.subr.mxu0 0.0
        %257 = vmatpush1.msra.mxu0 0.0
        %258 = vmatprep.subr.mxu0 0.0
        %259 = vmatpush1.msra.mxu0 0.0
        %260 = vmatprep.subr.mxu0 0.0
        %261 = vmatpush1.msra.mxu0 0.0
        %262 = vmatprep.subr.mxu0 0.0
        %263 = vmatpush1.msra.mxu0 0.0
        %264 = vmatprep.subr.mxu0 0.0
        %265 = vmatpush1.msra.mxu0 0.0
        %266 = vmatprep.subr.mxu0 0.0
        %267 = vmatpush1.msra.mxu0 0.0
        %268 = vmatprep.subr.mxu0 0.0
        %269 = vmatpush1.msra.mxu0 0.0
        %270 = vmatprep.subr.mxu0 0.0
        %271 = vmatpush1.msra.mxu0 0.0
        %272 = vmatprep.subr.mxu0 0.0
        %273 = vmatpush1.msra.mxu0 0.0
        %274 = vmatprep.subr.mxu0 0.0
        %275 = vmatpush1.msra.mxu0 0.0
        %276 = vmatprep.subr.mxu0 0.0
        %277 = vmatpush1.msra.mxu0 0.0
        %278 = vmatprep.subr.mxu0 0.0
        %279 = vmatpush1.msra.mxu0 0.0
        %280 = vmatprep.subr.mxu0 0.0
        %281 = vmatpush1.msra.mxu0 0.0
        %282 = vmatprep.subr.mxu0 0.0
        %283 = vmatpush1.msra.mxu0 0.0
        %284 = vmatprep.subr.mxu0 0.0
        %285 = vmatpush1.msra.mxu0 0.0
        %286 = vmatprep.subr.mxu0 0.0
        %287 = vmatpush1.msra.mxu0 0.0
        %288 = vmatprep.subr.mxu0 0.0
        %289 = vmatpush1.msra.mxu0 0.0
        %290 = vmatprep.subr.mxu0 0.0
        %291 = vmatpush1.msra.mxu0 0.0
        %292 = vmatprep.subr.mxu0 0.0
        %293 = vmatpush1.msra.mxu0 0.0
        %294 = vmatprep.subr.mxu0 0.0
        %295 = vmatpush1.msra.mxu0 0.0
        %296 = vmatprep.subr.mxu0 0.0
        %297 = vmatpush1.msra.mxu0 0.0
        %298 = vmatprep.subr.mxu0 0.0
        %299 = vmatpush1.msra.mxu0 0.0
        %300 = vmatprep.subr.mxu0 0.0
        %301 = vmatpush1.msra.mxu0 0.0
        %302 = vmatprep.subr.mxu0 0.0
        %303 = vmatpush1.msra.mxu0 0.0
        %304 = vmatprep.subr.mxu0 0.0
        %305 = vmatpush1.msra.mxu0 0.0
        %306 = vmatprep.subr.mxu0 0.0
        %307 = vmatpush1.msra.mxu0 0.0
        %308 = vmatprep.subr.mxu0 0.0
        %309 = vmatpush1.msra.mxu0 0.0
        %310 = vmatprep.mubr.f32.mxu0 0.0
        %311 = vmatmul.mubr.f32.gmra.mrb[0].mxu0 %v244
        %v312 = vpop.f32.mrb[0].mxu0
        %v313 = vadd.f32 0.0, %v312
        %v314 = vpop.f32.mrb[0].mxu0
        %315 = vdwg.mxu0
        %316 = vst [vmem:[%s221] sm:$0xff] %v313
        %317 = vadd.xlane.f32.xlu0 %v313
        %v318 = vpop.xlane.xlu0 %317
        %vm319 = vcmask 7168
        %320 = vst.msk [vmem:[%s237] sm:$0xff] %vm319, %v318
        %v321 = vmul.f32 %v313, %v313
        %322 = vadd.xlane.f32.xlu0 %v321
        %v323 = vpop.xlane.xlu0 %322
        %vm324 = vcmask 15368
        %325 = vst.msk [vmem:[%s237] sm:$0xff] %vm324, %v323
        %s326 = sand.u32 %s93, 1
        %s327 = scalar_lea.sflag [#allocation4], %s326
        %s328 = sand.u32 %s93, 1
        %s329 = smul.addr %s328, 8
        %s330 = scalar_lea.vmem [#allocation7], %s329
        %p331 = scmp.lt.s32.totalorder %s26, 1
        %s332 = scalar_select %p331, %s26, 1
        %p333 = scmp.lt.s32.totalorder %s27, 0
        %s334 = scalar_select %p333, %s27, 0
        %s335 = sadd.s32 %s334, %s332
        %s336 = smul.addr %s335, 8
        %s337 = scalar_lea.vmem %s3, %s336
        // Predicated region
        $region37: #{tpu_custom_call.1} parent=27 // pred_check
          %p338 = pneg %p103
        $region38: #{tpu_custom_call.1} parent=27 // pred_check_branch
          %340 = sbr.rel (%p338) target = $region40
        $region39: #{tpu_custom_call.1} parent=27 // pred_region
          %s342 = ssub.s32 128, 128
          %343 = vsyncadd %s327, %s342
          %s344 = sadd.s32 %s27, %s26
          %s345 = smul.addr %s344, 128
          %s346 = scalar_lea.hbm %s2, %s345
          %s348 = sshll.u32 %s330, 4
          %s349 = int_to_ptr.vmem [resolvable:$true] %s348
          %351 = dma.vmem_to_hbm [thread:$0]  %s349, 128, %s346, %s327
        $region40: #{tpu_custom_call.1} parent=27 // pred_fallthru
          _
        // Predicated region
        $region41: #{tpu_custom_call.1} parent=27 // pred_check
          %p352 = pneg %p131
        $region42: #{tpu_custom_call.1} parent=27 // pred_check_branch
          %354 = sbr.rel (%p352) target = $region44
        $region43: #{tpu_custom_call.1} parent=27 // pred_region
          _
        $region44: #{tpu_custom_call.1} parent=27 // pred_fallthru
          _
      $region28: #{tpu_custom_call.1} parent=5 // pred_fallthru
        _
      %p355 = scmp.le.s32.totalorder 2, %s17
      // Predicated region
      $region45: #{tpu_custom_call.1} parent=5 // pred_check
        %p356 = pneg %p355
      $region46: #{tpu_custom_call.1} parent=5 // pred_check_branch
        %358 = sbr.rel (%p356) target = $region48
      $region47: #{tpu_custom_call.1} parent=5 // pred_region
        %s359 = ssub.s32 %s17, 2
        // Predicated region
        $region49: #{tpu_custom_call.1} parent=47 // pred_check
          %p360 = pneg %p109
        $region50: #{tpu_custom_call.1} parent=47 // pred_check_branch
          %362 = sbr.rel (%p360) target = $region52
        $region51: #{tpu_custom_call.1} parent=47 // pred_region
          %s363 = sand.u32 %s94, 1
          %s364 = scalar_lea.sflag [#allocation4], %s363
          %s365 = sand.u32 %s94, 1
          %s366 = smul.addr %s365, 8
          %s367 = scalar_lea.vmem [#allocation7], %s366
          %368 = dma.done %s364, 128
        $region52: #{tpu_custom_call.1} parent=47 // pred_fallthru
          _
        // Predicated region
        $region53: #{tpu_custom_call.1} parent=47 // pred_check
          %p369 = pneg %p137
        $region54: #{tpu_custom_call.1} parent=47 // pred_check_branch
          %371 = sbr.rel (%p369) target = $region56
        $region55: #{tpu_custom_call.1} parent=47 // pred_region
          %p372 = scmp.lt.s32.totalorder %s28, 1
          %s373 = scalar_select %p372, %s28, 1
          %p374 = scmp.lt.s32.totalorder %s29, 0
          %s375 = scalar_select %p374, %s29, 0
          %s376 = sadd.s32 %s375, %s373
          %s377 = smul.addr %s376, 8
          %s378 = scalar_lea.vmem %s3, %s377
        $region56: #{tpu_custom_call.1} parent=47 // pred_fallthru
          _
      $region48: #{tpu_custom_call.1} parent=5 // pred_fallthru
        _
    $region6: #{tpu_custom_call.1} parent=1 // loop_footer
      %s21 = sadd.s32 1, %s17
    $region7: #{tpu_custom_call.1} parent=1 // loop_footer_branch
      %16 = sbr.rel target = $region3
    $region8: #{tpu_custom_call.1} parent=1 // loop_exit
      _
    %379 = vsyncpa [#allocation3], 1
    %s380 = scalar_lea.sflag [#allocation3], 1
    %381 = vsyncpa %s380, 1
    %382 = vsyncpa [#allocation6], 1
    %383 = vsyncpa [#allocation4], 1
    %s384 = scalar_lea.sflag [#allocation4], 1
    %385 = vsyncpa %s384, 1

</llo_original>
